<compile_context>
chip_gen: v7x
topology: tpu7x:2x2x1
jax: 0.10.0
libtpu: 0.0.40
codegen_flags: <defaults>
</compile_context>

<pallas_src>
import jax
import jax.numpy as jnp
from jax.experimental import pallas as pl
from jax.experimental.pallas import tpu as pltpu

_G = 8            # batch rows folded into the 128-lane axis
_TBP_MAX = 1024   # max packed rows per tile (= 8192 original rows, ~0.9 MiB/step)


def _round_up(x, m):
    return ((x + m - 1) // m) * m


def _ensemble_kernel(x_ref, w1_ref, b1_ref, wh_ref, out_ref):
    """out = relu(x_packed @ W1_blockdiag + b1_tiled) @ Wheads_blockdiag."""
    core = jnp.dot(
        x_ref[...], w1_ref[...],
        preferred_element_type=jnp.float32,
        precision=jax.lax.Precision.HIGHEST,
    ) + b1_ref[...]                        # (tbp, 80) + (1, 80) broadcast
    core = jnp.maximum(core, 0.0)
    out_ref[...] = jnp.dot(
        core, wh_ref[...],
        preferred_element_type=jnp.float32,
        precision=jax.lax.Precision.HIGHEST,
    ).astype(out_ref.dtype)                # (tbp, 96) lane-dense store


@jax.jit
def _ensemble_forward_packed(x, w1bd, b1t, whbd):
    """Returns fused head outputs of shape (B, E*A)."""
    B, _ = x.shape                  # (batch, 16)
    GF, GH = w1bd.shape             # (128, 80)
    GEA = whbd.shape[1]             # G * E * A
    EA = GEA // _G

    # Fold G rows into lanes: (B, 16) -> (Bp, 128).  Padded rows are discarded
    # after the kernel, so their (garbage) outputs never escape.
    B8 = _round_up(max(B, 1), _G)
    if B8 != B:
        x = jnp.pad(x, ((0, B8 - B), (0, 0)))
    Bp = B8 // _G
    xp = x.reshape(Bp, GF)

    # Packed-row tile: hard cap (never a whole-batch block on huge batches),
    # >=2 grid steps whenever the batch is big enough to split (v7x megacore),
    # remainder handled by padding to a tile multiple (cdiv-style grid).
    if Bp > _TBP_MAX:
        tbp = _TBP_MAX
    elif Bp >= 256:
        tbp = _round_up((Bp + 1) // 2, _G)
    else:
        tbp = _round_up(Bp, _G)
    Bp_pad = _round_up(Bp, tbp)
    if Bp_pad != Bp:
        xp = jnp.pad(xp, ((0, Bp_pad - Bp), (0, 0)))
    grid = (Bp_pad // tbp,)

    flops = 2 * Bp_pad * (GF * GH + GH * GEA)
    bytes_accessed = 4 * (Bp_pad * (GF + GEA) + GF * GH + GH + GH * GEA)

    outp = pl.pallas_call(
        _ensemble_kernel,
        out_shape=jax.ShapeDtypeStruct((Bp_pad, GEA), jnp.float32),
        grid_spec=pltpu.PrefetchScalarGridSpec(
            num_scalar_prefetch=0,
            grid=grid,
            in_specs=[
                pl.BlockSpec((tbp, GF), lambda i: (i, 0)),   # packed x tile (lane-dense)
                pl.BlockSpec((GF, GH), lambda i: (0, 0)),    # blockdiag W1^T (128, 80)
                pl.BlockSpec((1, GH), lambda i: (0, 0)),     # tiled bias (1, 80)
                pl.BlockSpec((GH, GEA), lambda i: (0, 0)),   # blockdiag head weights (80, 96)
            ],
            out_specs=pl.BlockSpec((tbp, GEA), lambda i: (i, 0)),
        ),
        compiler_params=pltpu.CompilerParams(
            dimension_semantics=("parallel",),   # batch tiles are independent
        ),
        cost_estimate=pl.CostEstimate(
            flops=flops, transcendentals=0, bytes_accessed=bytes_accessed
        ),
    )(xp, w1bd, b1t, whbd)

    # (Bp_pad, G*EA) -> (Bp_pad*G, EA) is a free row-major reshape; drop padding.
    return outp.reshape(Bp_pad * _G, EA)[:B]


class EnsembleNetPallas:
    """JAX/Pallas port of the PyTorch EnsembleNet forward pass."""

    def __init__(self, n_ensemble, n_actions, key, small_batch_jnp_threshold=0):
        self.n_ensemble = n_ensemble
        self.n_actions = n_actions
        # Below this batch size the Pallas call is pure launch overhead; a
        # plain-jnp (XLA-fused) path is used instead.  Default 0 == always
        # use the kernel (so this script exercises it).
        self.small_batch_jnp_threshold = small_batch_jnp_threshold

        k1, k2, k3 = jax.random.split(key, 3)

        # core Net: Linear(16 -> 10); weights_init => weight ~ N(0, 0.1)
        w1 = 0.1 * jax.random.normal(k1, (10, 16), dtype=jnp.float32)
        self.w1t = jnp.transpose(w1)                       # (16, 10)

        # bias: PyTorch default uniform(-1/sqrt(16), 1/sqrt(16)).
        # TODO(synk): different RNG stream than torch; structural parity only.
        bound = 1.0 / jnp.sqrt(16.0)
        self.b1 = jax.random.uniform(
            k2, (1, 10), minval=-bound, maxval=bound, dtype=jnp.float32
        )

        # heads: Linear(10 -> n_actions, bias=False); PyTorch default
        # kaiming-uniform approximated with uniform(-1/sqrt(10), 1/sqrt(10)).
        hb = 1.0 / jnp.sqrt(10.0)
        wh = jax.random.uniform(
            k3, (n_ensemble, n_actions, 10), minval=-hb, maxval=hb,
            dtype=jnp.float32
        )
        # per-head transposed weights (E, 10, A) — kept for reference checks
        self.wh = jnp.transpose(wh, (0, 2, 1))
        # fused head weights: (10, E*A), column block e == self.wh[e]
        self.whf = jnp.transpose(wh, (2, 0, 1)).reshape(10, n_ensemble * n_actions)

        # Lane-dense block-diagonal packing (8 batch rows per 128-lane vreg row).
        eye = jnp.eye(_G, dtype=jnp.float32)
        self.w1bd = jnp.kron(eye, self.w1t)                # (128, 80)
        self.b1t = jnp.tile(self.b1, (1, _G))              # (1, 80)
        self.whbd = jnp.kron(eye, self.whf)                # (80, G*E*A)

    def _forward_fused(self, x):
        if x.shape[0] < self.small_batch_jnp_threshold:
            hi = jax.lax.Precision.HIGHEST
            core = jnp.maximum(jnp.dot(x, self.w1t, precision=hi) + self.b1, 0.0)
            return jnp.dot(core, self.whf, precision=hi)
        return _ensemble_forward_packed(x, self.w1bd, self.b1t, self.whbd)

    def __call__(self, x, k=None):
        out2d = self._forward_fused(x)                        # (B, E*A)
        A = self.n_actions
        if k is not None:
            return out2d[:, k * A:(k + 1) * A]                # (B, A)
        return jnp.split(out2d, self.n_ensemble, axis=1)      # list of (B, A)


if __name__ == "__main__":
    key = jax.random.PRNGKey(0)
    key_params, key_x = jax.random.split(key)

    n_ensemble = 3
    n_actions = 4
    batch = 8

    model = EnsembleNetPallas(n_ensemble, n_actions, key_params)
    x = jax.random.normal(key_x, (batch, 16), dtype=jnp.float32)

    # forward with a specific head k
    out_k = jax.block_until_ready(model(x, k=1))
    assert out_k.shape == (batch, n_actions)

    # forward with k=None -> list of all head outputs (one kernel, one split)
    outs = [jax.block_until_ready(o) for o in model(x, k=None)]
    assert len(outs) == n_ensemble
    assert all(o.shape == (batch, n_actions) for o in outs)

    # sanity check vs. pure-JAX reference (HIGHEST precision on both sides)
    hi = jax.lax.Precision.HIGHEST
    core_ref = jnp.maximum(jnp.dot(x, model.w1t, precision=hi) + model.b1, 0.0)
    ref_k = jnp.dot(core_ref, model.wh[1], precision=hi)
    assert jnp.allclose(out_k, ref_k, atol=1e-5, rtol=1e-5)
    for e in range(n_ensemble):
        ref_e = jnp.dot(core_ref, model.wh[e], precision=hi)
        assert jnp.allclose(outs[e], ref_e, atol=1e-5, rtol=1e-5)

    # also exercise the non-multiple-of-8 / padded-tile path
    x_big = jax.random.normal(key_x, (300, 16), dtype=jnp.float32)
    out_big = jax.block_until_ready(model(x_big, k=0))
    core_big = jnp.maximum(jnp.dot(x_big, model.w1t, precision=hi) + model.b1, 0.0)
    ref_big = jnp.dot(core_big, model.wh[0], precision=hi)
    assert out_big.shape == (300, n_actions)
    assert jnp.allclose(out_big, ref_big, atol=1e-5, rtol=1e-5)

    print("KERNEL_OK")
</pallas_src>

<mosaic_0001>
module attributes {stable_mosaic.version = 11 : i64} {
  func.func @_ensemble_kernel(%arg0: i32, %arg1: memref<8x128xf32, #tpu.memory_space<vmem>>, %arg2: memref<128x80xf32, #tpu.memory_space<vmem>>, %arg3: memref<1x80xf32, #tpu.memory_space<vmem>>, %arg4: memref<80x96xf32, #tpu.memory_space<vmem>>, %arg5: memref<8x96xf32, #tpu.memory_space<vmem>>) attributes {dimension_semantics = [#tpu.dimension_semantics<parallel>], iteration_bounds = array<i64: 1>, scalar_prefetch = 0 : i64, scratch_operands = 0 : i64, tpu.core_type = #tpu.core_type<tc>, window_params = [{transform_indices = @transform_0, window_bounds = array<i64: 8, 128>}, {pipeline_mode = #tpu.pipeline_mode<synchronous>, transform_indices = @transform_1, window_bounds = array<i64: 128, 80>}, {pipeline_mode = #tpu.pipeline_mode<synchronous>, transform_indices = @transform_2, window_bounds = array<i64: 1, 80>}, {pipeline_mode = #tpu.pipeline_mode<synchronous>, transform_indices = @transform_3, window_bounds = array<i64: 80, 96>}, {transform_indices = @transform_4, window_bounds = array<i64: 8, 96>}]} {
    %c0 = arith.constant 0 : index
    %c0_0 = arith.constant 0 : index
    %0 = vector.load %arg1[%c0, %c0_0] : memref<8x128xf32, #tpu.memory_space<vmem>>, vector<8x128xf32>
    %c0_1 = arith.constant 0 : index
    %c0_2 = arith.constant 0 : index
    %1 = vector.load %arg2[%c0_1, %c0_2] : memref<128x80xf32, #tpu.memory_space<vmem>>, vector<128x80xf32>
    %cst = arith.constant dense<0.000000e+00> : vector<8x80xf32>
    %2 = tpu.matmul %0, %1, %cst {dimension_numbers = #tpu.dot_dimension_numbers<[1], [0], [0], [1], [0, 0, 1, 1], [], []>, precision = #tpu.contract_precision<fp32>} : vector<8x128xf32>, vector<128x80xf32>, vector<8x80xf32> -> vector<8x80xf32>
    %c0_3 = arith.constant 0 : index
    %c0_4 = arith.constant 0 : index
    %3 = vector.load %arg3[%c0_3, %c0_4] : memref<1x80xf32, #tpu.memory_space<vmem>>, vector<1x80xf32>
    %4 = vector.broadcast %3 : vector<1x80xf32> to vector<8x80xf32>
    %5 = arith.addf %2, %4 : vector<8x80xf32>
    %cst_5 = arith.constant 0.000000e+00 : f32
    %6 = vector.broadcast %cst_5 : f32 to vector<8x80xf32>
    %7 = arith.maximumf %5, %6 : vector<8x80xf32>
    %c0_6 = arith.constant 0 : index
    %c0_7 = arith.constant 0 : index
    %8 = vector.load %arg4[%c0_6, %c0_7] : memref<80x96xf32, #tpu.memory_space<vmem>>, vector<80x96xf32>
    %cst_8 = arith.constant dense<0.000000e+00> : vector<8x96xf32>
    %9 = tpu.matmul %7, %8, %cst_8 {dimension_numbers = #tpu.dot_dimension_numbers<[1], [0], [0], [1], [0, 0, 1, 1], [], []>, precision = #tpu.contract_precision<fp32>} : vector<8x80xf32>, vector<80x96xf32>, vector<8x96xf32> -> vector<8x96xf32>
    %c0_9 = arith.constant 0 : index
    %c0_10 = arith.constant 0 : index
    %10 = vector.load %arg5[%c0_9, %c0_10] : memref<8x96xf32, #tpu.memory_space<vmem>>, vector<8x96xf32>
    tpu.vector_store %arg5[%c0_9, %c0_10], %9 {strides = array<i32>} : memref<8x96xf32, #tpu.memory_space<vmem>>, vector<8x96xf32>,
    return
  }
  func.func @transform_0(%arg0: i32) -> (i32, i32) {
    %c0_i32 = arith.constant 0 : i32
    %c0_i32_0 = arith.constant 0 : i32
    return %arg0, %c0_i32 : i32, i32
  }
  func.func @transform_1(%arg0: i32) -> (i32, i32) {
    %c0_i32 = arith.constant 0 : i32
    %c0_i32_0 = arith.constant 0 : i32
    %c0_i32_1 = arith.constant 0 : i32
    return %c0_i32, %c0_i32_0 : i32, i32
  }
  func.func @transform_2(%arg0: i32) -> (i32, i32) {
    %c0_i32 = arith.constant 0 : i32
    %c0_i32_0 = arith.constant 0 : i32
    %c0_i32_1 = arith.constant 0 : i32
    return %c0_i32, %c0_i32_0 : i32, i32
  }
  func.func @transform_3(%arg0: i32) -> (i32, i32) {
    %c0_i32 = arith.constant 0 : i32
    %c0_i32_0 = arith.constant 0 : i32
    %c0_i32_1 = arith.constant 0 : i32
    return %c0_i32, %c0_i32_0 : i32, i32
  }
  func.func @transform_4(%arg0: i32) -> (i32, i32) {
    %c0_i32 = arith.constant 0 : i32
    %c0_i32_0 = arith.constant 0 : i32
    return %arg0, %c0_i32 : i32, i32
  }
}

</mosaic_0001>

<llo_original>
// kernel: _ensemble_forward_packed.1
$region0: #{_ensemble_forward_packed.1}
  #allocation0 [shape = 'u32[]', space=smem, size = 0x4, offset = 0x4, fixed_abs, tag = 'smem constant byte address 0x4 - core index']
  #allocation1 [shape = 'u32[144,128]{1,0:T(1,128)}', space=vmem, size = 0x12000, scoped, tag = 'internal scratch']
  %s0 = inlined_call_operand.vmem [shape: f32[8,128], index: 0, kind: input, shape index: {}]
  %s1 = inlined_call_operand.vmem [shape: f32[128,80], index: 1, kind: input, shape index: {}]
  %s2 = inlined_call_operand.vmem [shape: f32[1,80], index: 2, kind: input, shape index: {}]
  %s3 = inlined_call_operand.vmem [shape: f32[80,96], index: 3, kind: input, shape index: {}]
  %s4 = inlined_call_operand.vmem [shape: f32[8,96], index: 4, kind: output, shape index: {}]
  %s5 = sld [smem:[#allocation0]]
  $region26: #{_ensemble_forward_packed.1} parent=0
    _
  %s7 = ssub.s32 1, %s5
  %s8 = scalar_select 0, %s7, %s5
  // Predicated region
  $region2: #{_ensemble_forward_packed.1} parent=0 // pred_check
    _
  $region3: #{_ensemble_forward_packed.1} parent=0 // pred_check_branch
    %10 = sbr.rel (0) target = $region5
  $region4: #{_ensemble_forward_packed.1} parent=0 // pred_region
    _
  $region5: #{_ensemble_forward_packed.1} parent=0 // pred_fallthru
    _
  // Predicated region
  $region6: #{_ensemble_forward_packed.1} parent=0 // pred_check
    _
  $region7: #{_ensemble_forward_packed.1} parent=0 // pred_check_branch
    %12 = sbr.rel (0) target = $region9
  $region8: #{_ensemble_forward_packed.1} parent=0 // pred_region
    _
  $region9: #{_ensemble_forward_packed.1} parent=0 // pred_fallthru
    _
  // Predicated region
  $region10: #{_ensemble_forward_packed.1} parent=0 // pred_check
    _
  $region11: #{_ensemble_forward_packed.1} parent=0 // pred_check_branch
    %14 = sbr.rel (0) target = $region13
  $region12: #{_ensemble_forward_packed.1} parent=0 // pred_region
    _
  $region13: #{_ensemble_forward_packed.1} parent=0 // pred_fallthru
    _
  // Predicated region
  $region14: #{_ensemble_forward_packed.1} parent=0 // pred_check
    _
  $region15: #{_ensemble_forward_packed.1} parent=0 // pred_check_branch
    %16 = sbr.rel (0) target = $region17
  $region16: #{_ensemble_forward_packed.1} parent=0 // pred_region
    _
  $region17: #{_ensemble_forward_packed.1} parent=0 // pred_fallthru
    _
  %v17 = vld [vmem:[%s0] sm:$0xff]
  %v18 = vld [vmem:[%s1] sm:$0xff]
  %v19 = vld [vmem:[%s1 + $0x8] sm:$0xff]
  %v20 = vld [vmem:[%s1 + $0x10] sm:$0xff]
  %v21 = vld [vmem:[%s1 + $0x18] sm:$0xff]
  %v22 = vld [vmem:[%s1 + $0x20] sm:$0xff]
  %v23 = vld [vmem:[%s1 + $0x28] sm:$0xff]
  %v24 = vld [vmem:[%s1 + $0x30] sm:$0xff]
  %v25 = vld [vmem:[%s1 + $0x38] sm:$0xff]
  %v26 = vld [vmem:[%s1 + $0x40] sm:$0xff]
  %v27 = vld [vmem:[%s1 + $0x48] sm:$0xff]
  %v28 = vld [vmem:[%s1 + $0x50] sm:$0xff]
  %v29 = vld [vmem:[%s1 + $0x58] sm:$0xff]
  %v30 = vld [vmem:[%s1 + $0x60] sm:$0xff]
  %v31 = vld [vmem:[%s1 + $0x68] sm:$0xff]
  %v32 = vld [vmem:[%s1 + $0x70] sm:$0xff]
  %v33 = vld [vmem:[%s1 + $0x78] sm:$0xff]
  %v34 = vld [vmem:[%s2] sm:$0x1]
  %v36 = vlaneseq
  %v37 = vshrl.u32 %v36, 7
  %v38 = vsub.s32 0, %v37
  %v39 = vrot.slane %v34, %v38
  %41 = vmatprep.subr.mxu0 0.0
  %v42 = vand.u32 %v18, 4294901760
  %43 = vmatpush1.msra.mxu0 %v42
  %44 = vmatprep.subr.mxu0 0.0
  %v45 = vand.u32 %v19, 4294901760
  %46 = vmatpush1.msra.mxu0 %v45
  %47 = vmatprep.subr.mxu0 0.0
  %v48 = vand.u32 %v20, 4294901760
  %49 = vmatpush1.msra.mxu0 %v48
  %50 = vmatprep.subr.mxu0 0.0
  %v51 = vand.u32 %v21, 4294901760
  %52 = vmatpush1.msra.mxu0 %v51
  %53 = vmatprep.subr.mxu0 0.0
  %v54 = vand.u32 %v22, 4294901760
  %55 = vmatpush1.msra.mxu0 %v54
  %56 = vmatprep.subr.mxu0 0.0
  %v57 = vand.u32 %v23, 4294901760
  %58 = vmatpush1.msra.mxu0 %v57
  %59 = vmatprep.subr.mxu0 0.0
  %v60 = vand.u32 %v24, 4294901760
  %61 = vmatpush1.msra.mxu0 %v60
  %62 = vmatprep.subr.mxu0 0.0
  %v63 = vand.u32 %v25, 4294901760
  %64 = vmatpush1.msra.mxu0 %v63
  %65 = vmatprep.subr.mxu0 0.0
  %v66 = vand.u32 %v26, 4294901760
  %67 = vmatpush1.msra.mxu0 %v66
  %68 = vmatprep.subr.mxu0 0.0
  %v69 = vand.u32 %v27, 4294901760
  %70 = vmatpush1.msra.mxu0 %v69
  %71 = vmatprep.subr.mxu0 0.0
  %v72 = vand.u32 %v28, 4294901760
  %73 = vmatpush1.msra.mxu0 %v72
  %74 = vmatprep.subr.mxu0 0.0
  %v75 = vand.u32 %v29, 4294901760
  %76 = vmatpush1.msra.mxu0 %v75
  %77 = vmatprep.subr.mxu0 0.0
  %v78 = vand.u32 %v30, 4294901760
  %79 = vmatpush1.msra.mxu0 %v78
  %80 = vmatprep.subr.mxu0 0.0
  %v81 = vand.u32 %v31, 4294901760
  %82 = vmatpush1.msra.mxu0 %v81
  %83 = vmatprep.subr.mxu0 0.0
  %v84 = vand.u32 %v32, 4294901760
  %85 = vmatpush1.msra.mxu0 %v84
  %86 = vmatprep.subr.mxu0 0.0
  %v87 = vand.u32 %v33, 4294901760
  %88 = vmatpush1.msra.mxu0 %v87
  %89 = vmatprep.subr.mxu0 0.0
  %90 = vmatpush1.msra.mxu0 0.0
  %91 = vmatprep.subr.mxu0 0.0
  %92 = vmatpush1.msra.mxu0 0.0
  %93 = vmatprep.subr.mxu0 0.0
  %94 = vmatpush1.msra.mxu0 0.0
  %95 = vmatprep.subr.mxu0 0.0
  %96 = vmatpush1.msra.mxu0 0.0
  %97 = vmatprep.subr.mxu0 0.0
  %98 = vmatpush1.msra.mxu0 0.0
  %99 = vmatprep.subr.mxu0 0.0
  %100 = vmatpush1.msra.mxu0 0.0
  %101 = vmatprep.subr.mxu0 0.0
  %102 = vmatpush1.msra.mxu0 0.0
  %103 = vmatprep.subr.mxu0 0.0
  %104 = vmatpush1.msra.mxu0 0.0
  %105 = vmatprep.subr.mxu0 0.0
  %106 = vmatpush1.msra.mxu0 0.0
  %107 = vmatprep.subr.mxu0 0.0
  %108 = vmatpush1.msra.mxu0 0.0
  %109 = vmatprep.subr.mxu0 0.0
  %110 = vmatpush1.msra.mxu0 0.0
  %111 = vmatprep.subr.mxu0 0.0
  %112 = vmatpush1.msra.mxu0 0.0
  %113 = vmatprep.subr.mxu0 0.0
  %114 = vmatpush1.msra.mxu0 0.0
  %115 = vmatprep.subr.mxu0 0.0
  %116 = vmatpush1.msra.mxu0 0.0
  %117 = vmatprep.subr.mxu0 0.0
  %118 = vmatpush1.msra.mxu0 0.0
  %119 = vmatprep.subr.mxu0 0.0
  %120 = vmatpush1.msra.mxu0 0.0
  %121 = vmatprep.mubr.f32.mxu0 0.0
  %v122 = vand.u32 %v17, 4294901760
  %v123 = vsub.f32 %v17, %v122
  %v124 = vand.u32 %v123, 4294901760
  %v125 = vsub.f32 %v123, %v124
  %v126 = vand.u32 %v125, 4294901760
  %127 = vmatmul.mubr.f32.gmra.mrb[0].mxu0 %v126
  %v128 = vpop.f32.mrb[0].mxu0
  %v129 = vadd.f32 %v39, %v128
  %v130 = vpop.f32.mrb[0].mxu0
  %131 = vdwg.mxu0
  %132 = vmatprep.subr.mxu0 0.0
  %v133 = vand.u32 %v18, 4294901760
  %v134 = vsub.f32 %v18, %v133
  %v135 = vand.u32 %v134, 4294901760
  %v136 = vsub.f32 %v134, %v135
  %v137 = vand.u32 %v136, 4294901760
  %138 = vmatpush1.msra.mxu0 %v137
  %139 = vmatprep.subr.mxu0 0.0
  %v140 = vand.u32 %v19, 4294901760
  %v141 = vsub.f32 %v19, %v140
  %v142 = vand.u32 %v141, 4294901760
  %v143 = vsub.f32 %v141, %v142
  %v144 = vand.u32 %v143, 4294901760
  %145 = vmatpush1.msra.mxu0 %v144
  %146 = vmatprep.subr.mxu0 0.0
  %v147 = vand.u32 %v20, 4294901760
  %v148 = vsub.f32 %v20, %v147
  %v149 = vand.u32 %v148, 4294901760
  %v150 = vsub.f32 %v148, %v149
  %v151 = vand.u32 %v150, 4294901760
  %152 = vmatpush1.msra.mxu0 %v151
  %153 = vmatprep.subr.mxu0 0.0
  %v154 = vand.u32 %v21, 4294901760
  %v155 = vsub.f32 %v21, %v154
  %v156 = vand.u32 %v155, 4294901760
  %v157 = vsub.f32 %v155, %v156
  %v158 = vand.u32 %v157, 4294901760
  %159 = vmatpush1.msra.mxu0 %v158
  %160 = vmatprep.subr.mxu0 0.0
  %v161 = vand.u32 %v22, 4294901760
  %v162 = vsub.f32 %v22, %v161
  %v163 = vand.u32 %v162, 4294901760
  %v164 = vsub.f32 %v162, %v163
  %v165 = vand.u32 %v164, 4294901760
  %166 = vmatpush1.msra.mxu0 %v165
  %167 = vmatprep.subr.mxu0 0.0
  %v168 = vand.u32 %v23, 4294901760
  %v169 = vsub.f32 %v23, %v168
  %v170 = vand.u32 %v169, 4294901760
  %v171 = vsub.f32 %v169, %v170
  %v172 = vand.u32 %v171, 4294901760
  %173 = vmatpush1.msra.mxu0 %v172
  %174 = vmatprep.subr.mxu0 0.0
  %v175 = vand.u32 %v24, 4294901760
  %v176 = vsub.f32 %v24, %v175
  %v177 = vand.u32 %v176, 4294901760
  %v178 = vsub.f32 %v176, %v177
  %v179 = vand.u32 %v178, 4294901760
  %180 = vmatpush1.msra.mxu0 %v179
  %181 = vmatprep.subr.mxu0 0.0
  %v182 = vand.u32 %v25, 4294901760
  %v183 = vsub.f32 %v25, %v182
  %v184 = vand.u32 %v183, 4294901760
  %v185 = vsub.f32 %v183, %v184
  %v186 = vand.u32 %v185, 4294901760
  %187 = vmatpush1.msra.mxu0 %v186
  %188 = vmatprep.subr.mxu0 0.0
  %v189 = vand.u32 %v26, 4294901760
  %v190 = vsub.f32 %v26, %v189
  %v191 = vand.u32 %v190, 4294901760
  %v192 = vsub.f32 %v190, %v191
  %v193 = vand.u32 %v192, 4294901760
  %194 = vmatpush1.msra.mxu0 %v193
  %195 = vmatprep.subr.mxu0 0.0
  %v196 = vand.u32 %v27, 4294901760
  %v197 = vsub.f32 %v27, %v196
  %v198 = vand.u32 %v197, 4294901760
  %v199 = vsub.f32 %v197, %v198
  %v200 = vand.u32 %v199, 4294901760
  %201 = vmatpush1.msra.mxu0 %v200
  %202 = vmatprep.subr.mxu0 0.0
  %v203 = vand.u32 %v28, 4294901760
  %v204 = vsub.f32 %v28, %v203
  %v205 = vand.u32 %v204, 4294901760
  %v206 = vsub.f32 %v204, %v205
  %v207 = vand.u32 %v206, 4294901760
  %208 = vmatpush1.msra.mxu0 %v207
  %209 = vmatprep.subr.mxu0 0.0
  %v210 = vand.u32 %v29, 4294901760
  %v211 = vsub.f32 %v29, %v210
  %v212 = vand.u32 %v211, 4294901760
  %v213 = vsub.f32 %v211, %v212
  %v214 = vand.u32 %v213, 4294901760
  %215 = vmatpush1.msra.mxu0 %v214
  %216 = vmatprep.subr.mxu0 0.0
  %v217 = vand.u32 %v30, 4294901760
  %v218 = vsub.f32 %v30, %v217
  %v219 = vand.u32 %v218, 4294901760
  %v220 = vsub.f32 %v218, %v219
  %v221 = vand.u32 %v220, 4294901760
  %222 = vmatpush1.msra.mxu0 %v221
  %223 = vmatprep.subr.mxu0 0.0
  %v224 = vand.u32 %v31, 4294901760
  %v225 = vsub.f32 %v31, %v224
  %v226 = vand.u32 %v225, 4294901760
  %v227 = vsub.f32 %v225, %v226
  %v228 = vand.u32 %v227, 4294901760
  %229 = vmatpush1.msra.mxu0 %v228
  %230 = vmatprep.subr.mxu0 0.0
  %v231 = vand.u32 %v32, 4294901760
  %v232 = vsub.f32 %v32, %v231
  %v233 = vand.u32 %v232, 4294901760
  %v234 = vsub.f32 %v232, %v233
  %v235 = vand.u32 %v234, 4294901760
  %236 = vmatpush1.msra.mxu0 %v235
  %237 = vmatprep.subr.mxu0 0.0
  %v238 = vand.u32 %v33, 4294901760
  %v239 = vsub.f32 %v33, %v238
  %v240 = vand.u32 %v239, 4294901760
  %v241 = vsub.f32 %v239, %v240
  %v242 = vand.u32 %v241, 4294901760
  %243 = vmatpush1.msra.mxu0 %v242
  %244 = vmatprep.subr.mxu0 0.0
  %245 = vmatpush1.msra.mxu0 0.0
  %246 = vmatprep.subr.mxu0 0.0
  %247 = vmatpush1.msra.mxu0 0.0
  %248 = vmatprep.subr.mxu0 0.0
  %249 = vmatpush1.msra.mxu0 0.0
  %250 = vmatprep.subr.mxu0 0.0
  %251 = vmatpush1.msra.mxu0 0.0
  %252 = vmatprep.subr.mxu0 0.0
  %253 = vmatpush1.msra.mxu0 0.0
  %254 = vmatprep.subr.mxu0 0.0
  %255 = vmatpush1.msra.mxu0 0.0
  %256 = vmatprep.subr.mxu0 0.0
  %257 = vmatpush1.msra.mxu0 0.0
  %258 = vmatprep.subr.mxu0 0.0
  %259 = vmatpush1.msra.mxu0 0.0
  %260 = vmatprep.subr.mxu0 0.0
  %261 = vmatpush1.msra.mxu0 0.0
  %262 = vmatprep.subr.mxu0 0.0
  %263 = vmatpush1.msra.mxu0 0.0
  %264 = vmatprep.subr.mxu0 0.0
  %265 = vmatpush1.msra.mxu0 0.0
  %266 = vmatprep.subr.mxu0 0.0
  %267 = vmatpush1.msra.mxu0 0.0
  %268 = vmatprep.subr.mxu0 0.0
  %269 = vmatpush1.msra.mxu0 0.0
  %270 = vmatprep.subr.mxu0 0.0
  %271 = vmatpush1.msra.mxu0 0.0
  %272 = vmatprep.subr.mxu0 0.0
  %273 = vmatpush1.msra.mxu0 0.0
  %274 = vmatprep.subr.mxu0 0.0
  %275 = vmatpush1.msra.mxu0 0.0
  %276 = vmatprep.mubr.f32.mxu0 0.0
  %v277 = vand.u32 %v17, 4294901760
  %278 = vmatmul.mubr.f32.gmra.mrb[0].mxu0 %v277
  %v279 = vpop.f32.mrb[0].mxu0
  %v280 = vadd.f32 %v129, %v279
  %v281 = vpop.f32.mrb[0].mxu0
  %282 = vdwg.mxu0
  %283 = vmatprep.subr.mxu0 0.0
  %v284 = vand.u32 %v18, 4294901760
  %v285 = vsub.f32 %v18, %v284
  %286 = vmatpush1.msra.mxu0 %v285
  %287 = vmatprep.subr.mxu0 0.0
  %v288 = vand.u32 %v19, 4294901760
  %v289 = vsub.f32 %v19, %v288
  %290 = vmatpush1.msra.mxu0 %v289
  %291 = vmatprep.subr.mxu0 0.0
  %v292 = vand.u32 %v20, 4294901760
  %v293 = vsub.f32 %v20, %v292
  %294 = vmatpush1.msra.mxu0 %v293
  %295 = vmatprep.subr.mxu0 0.0
  %v296 = vand.u32 %v21, 4294901760
  %v297 = vsub.f32 %v21, %v296
  %298 = vmatpush1.msra.mxu0 %v297
  %299 = vmatprep.subr.mxu0 0.0
  %v300 = vand.u32 %v22, 4294901760
  %v301 = vsub.f32 %v22, %v300
  %302 = vmatpush1.msra.mxu0 %v301
  %303 = vmatprep.subr.mxu0 0.0
  %v304 = vand.u32 %v23, 4294901760
  %v305 = vsub.f32 %v23, %v304
  %306 = vmatpush1.msra.mxu0 %v305
  %307 = vmatprep.subr.mxu0 0.0
  %v308 = vand.u32 %v24, 4294901760
  %v309 = vsub.f32 %v24, %v308
  %310 = vmatpush1.msra.mxu0 %v309
  %311 = vmatprep.subr.mxu0 0.0
  %v312 = vand.u32 %v25, 4294901760
  %v313 = vsub.f32 %v25, %v312
  %314 = vmatpush1.msra.mxu0 %v313
  %315 = vmatprep.subr.mxu0 0.0
  %v316 = vand.u32 %v26, 4294901760
  %v317 = vsub.f32 %v26, %v316
  %318 = vmatpush1.msra.mxu0 %v317
  %319 = vmatprep.subr.mxu0 0.0
  %v320 = vand.u32 %v27, 4294901760
  %v321 = vsub.f32 %v27, %v320
  %322 = vmatpush1.msra.mxu0 %v321
  %323 = vmatprep.subr.mxu0 0.0
  %v324 = vand.u32 %v28, 4294901760
  %v325 = vsub.f32 %v28, %v324
  %326 = vmatpush1.msra.mxu0 %v325
  %327 = vmatprep.subr.mxu0 0.0
  %v328 = vand.u32 %v29, 4294901760
  %v329 = vsub.f32 %v29, %v328
  %330 = vmatpush1.msra.mxu0 %v329
  %331 = vmatprep.subr.mxu0 0.0
  %v332 = vand.u32 %v30, 4294901760
  %v333 = vsub.f32 %v30, %v332
  %334 = vmatpush1.msra.mxu0 %v333
  %335 = vmatprep.subr.mxu0 0.0
  %v336 = vand.u32 %v31, 4294901760
  %v337 = vsub.f32 %v31, %v336
  %338 = vmatpush1.msra.mxu0 %v337
  %339 = vmatprep.subr.mxu0 0.0
  %v340 = vand.u32 %v32, 4294901760
  %v341 = vsub.f32 %v32, %v340
  %342 = vmatpush1.msra.mxu0 %v341
  %343 = vmatprep.subr.mxu0 0.0
  %v344 = vand.u32 %v33, 4294901760
  %v345 = vsub.f32 %v33, %v344
  %346 = vmatpush1.msra.mxu0 %v345
  %347 = vmatprep.subr.mxu0 0.0
  %348 = vmatpush1.msra.mxu0 0.0
  %349 = vmatprep.subr.mxu0 0.0
  %350 = vmatpush1.msra.mxu0 0.0
  %351 = vmatprep.subr.mxu0 0.0
  %352 = vmatpush1.msra.mxu0 0.0
  %353 = vmatprep.subr.mxu0 0.0
  %354 = vmatpush1.msra.mxu0 0.0
  %355 = vmatprep.subr.mxu0 0.0
  %356 = vmatpush1.msra.mxu0 0.0
  %357 = vmatprep.subr.mxu0 0.0
  %358 = vmatpush1.msra.mxu0 0.0
  %359 = vmatprep.subr.mxu0 0.0
  %360 = vmatpush1.msra.mxu0 0.0
  %361 = vmatprep.subr.mxu0 0.0
  %362 = vmatpush1.msra.mxu0 0.0
  %363 = vmatprep.subr.mxu0 0.0
  %364 = vmatpush1.msra.mxu0 0.0
  %365 = vmatprep.subr.mxu0 0.0
  %366 = vmatpush1.msra.mxu0 0.0
  %367 = vmatprep.subr.mxu0 0.0
  %368 = vmatpush1.msra.mxu0 0.0
  %369 = vmatprep.subr.mxu0 0.0
  %370 = vmatpush1.msra.mxu0 0.0
  %371 = vmatprep.subr.mxu0 0.0
  %372 = vmatpush1.msra.mxu0 0.0
  %373 = vmatprep.subr.mxu0 0.0
  %374 = vmatpush1.msra.mxu0 0.0
  %375 = vmatprep.subr.mxu0 0.0
  %376 = vmatpush1.msra.mxu0 0.0
  %377 = vmatprep.subr.mxu0 0.0
  %378 = vmatpush1.msra.mxu0 0.0
  %379 = vmatprep.mubr.f32.mxu0 0.0
  %v380 = vand.u32 %v17, 4294901760
  %v381 = vsub.f32 %v17, %v380
  %382 = vmatmul.mubr.f32.gmra.mrb[0].mxu0 %v381
  %v383 = vpop.f32.mrb[0].mxu0
  %v384 = vadd.f32 %v280, %v383
  %v385 = vpop.f32.mrb[0].mxu0
  %386 = vdwg.mxu0
  %387 = vmatprep.subr.mxu0 0.0
  %v388 = vand.u32 %v18, 4294901760
  %389 = vmatpush1.msra.mxu0 %v388
  %390 = vmatprep.subr.mxu0 0.0
  %v391 = vand.u32 %v19, 4294901760
  %392 = vmatpush1.msra.mxu0 %v391
  %393 = vmatprep.subr.mxu0 0.0
  %v394 = vand.u32 %v20, 4294901760
  %395 = vmatpush1.msra.mxu0 %v394
  %396 = vmatprep.subr.mxu0 0.0
  %v397 = vand.u32 %v21, 4294901760
  %398 = vmatpush1.msra.mxu0 %v397
  %399 = vmatprep.subr.mxu0 0.0
  %v400 = vand.u32 %v22, 4294901760
  %401 = vmatpush1.msra.mxu0 %v400
  %402 = vmatprep.subr.mxu0 0.0
  %v403 = vand.u32 %v23, 4294901760
  %404 = vmatpush1.msra.mxu0 %v403
  %405 = vmatprep.subr.mxu0 0.0
  %v406 = vand.u32 %v24, 4294901760
  %407 = vmatpush1.msra.mxu0 %v406
  %408 = vmatprep.subr.mxu0 0.0
  %v409 = vand.u32 %v25, 4294901760
  %410 = vmatpush1.msra.mxu0 %v409
  %411 = vmatprep.subr.mxu0 0.0
  %v412 = vand.u32 %v26, 4294901760
  %413 = vmatpush1.msra.mxu0 %v412
  %414 = vmatprep.subr.mxu0 0.0
  %v415 = vand.u32 %v27, 4294901760
  %416 = vmatpush1.msra.mxu0 %v415
  %417 = vmatprep.subr.mxu0 0.0
  %v418 = vand.u32 %v28, 4294901760
  %419 = vmatpush1.msra.mxu0 %v418
  %420 = vmatprep.subr.mxu0 0.0
  %v421 = vand.u32 %v29, 4294901760
  %422 = vmatpush1.msra.mxu0 %v421
  %423 = vmatprep.subr.mxu0 0.0
  %v424 = vand.u32 %v30, 4294901760
  %425 = vmatpush1.msra.mxu0 %v424
  %426 = vmatprep.subr.mxu0 0.0
  %v427 = vand.u32 %v31, 4294901760
  %428 = vmatpush1.msra.mxu0 %v427
  %429 = vmatprep.subr.mxu0 0.0
  %v430 = vand.u32 %v32, 4294901760
  %431 = vmatpush1.msra.mxu0 %v430
  %432 = vmatprep.subr.mxu0 0.0
  %v433 = vand.u32 %v33, 4294901760
  %434 = vmatpush1.msra.mxu0 %v433
  %435 = vmatprep.subr.mxu0 0.0
  %436 = vmatpush1.msra.mxu0 0.0
  %437 = vmatprep.subr.mxu0 0.0
  %438 = vmatpush1.msra.mxu0 0.0
  %439 = vmatprep.subr.mxu0 0.0
  %440 = vmatpush1.msra.mxu0 0.0
  %441 = vmatprep.subr.mxu0 0.0
  %442 = vmatpush1.msra.mxu0 0.0
  %443 = vmatprep.subr.mxu0 0.0
  %444 = vmatpush1.msra.mxu0 0.0
  %445 = vmatprep.subr.mxu0 0.0
  %446 = vmatpush1.msra.mxu0 0.0
  %447 = vmatprep.subr.mxu0 0.0
  %448 = vmatpush1.msra.mxu0 0.0
  %449 = vmatprep.subr.mxu0 0.0
  %450 = vmatpush1.msra.mxu0 0.0
  %451 = vmatprep.subr.mxu0 0.0
  %452 = vmatpush1.msra.mxu0 0.0
  %453 = vmatprep.subr.mxu0 0.0
  %454 = vmatpush1.msra.mxu0 0.0
  %455 = vmatprep.subr.mxu0 0.0
  %456 = vmatpush1.msra.mxu0 0.0
  %457 = vmatprep.subr.mxu0 0.0
  %458 = vmatpush1.msra.mxu0 0.0
  %459 = vmatprep.subr.mxu0 0.0
  %460 = vmatpush1.msra.mxu0 0.0
  %461 = vmatprep.subr.mxu0 0.0
  %462 = vmatpush1.msra.mxu0 0.0
  %463 = vmatprep.subr.mxu0 0.0
  %464 = vmatpush1.msra.mxu0 0.0
  %465 = vmatprep.subr.mxu0 0.0
  %466 = vmatpush1.msra.mxu0 0.0
  %467 = vmatprep.mubr.f32.mxu0 0.0
  %v468 = vand.u32 %v17, 4294901760
  %v469 = vsub.f32 %v17, %v468
  %v470 = vand.u32 %v469, 4294901760
  %471 = vmatmul.mubr.f32.gmra.mrb[0].mxu0 %v470
  %v472 = vpop.f32.mrb[0].mxu0
  %v473 = vadd.f32 %v384, %v472
  %v474 = vpop.f32.mrb[0].mxu0
  %475 = vdwg.mxu0
  %476 = vmatprep.subr.mxu0 0.0
  %v477 = vand.u32 %v18, 4294901760
  %v478 = vsub.f32 %v18, %v477
  %v479 = vand.u32 %v478, 4294901760
  %480 = vmatpush1.msra.mxu0 %v479
  %481 = vmatprep.subr.mxu0 0.0
  %v482 = vand.u32 %v19, 4294901760
  %v483 = vsub.f32 %v19, %v482
  %v484 = vand.u32 %v483, 4294901760
  %485 = vmatpush1.msra.mxu0 %v484
  %486 = vmatprep.subr.mxu0 0.0
  %v487 = vand.u32 %v20, 4294901760
  %v488 = vsub.f32 %v20, %v487
  %v489 = vand.u32 %v488, 4294901760
  %490 = vmatpush1.msra.mxu0 %v489
  %491 = vmatprep.subr.mxu0 0.0
  %v492 = vand.u32 %v21, 4294901760
  %v493 = vsub.f32 %v21, %v492
  %v494 = vand.u32 %v493, 4294901760
  %495 = vmatpush1.msra.mxu0 %v494
  %496 = vmatprep.subr.mxu0 0.0
  %v497 = vand.u32 %v22, 4294901760
  %v498 = vsub.f32 %v22, %v497
  %v499 = vand.u32 %v498, 4294901760
  %500 = vmatpush1.msra.mxu0 %v499
  %501 = vmatprep.subr.mxu0 0.0
  %v502 = vand.u32 %v23, 4294901760
  %v503 = vsub.f32 %v23, %v502
  %v504 = vand.u32 %v503, 4294901760
  %505 = vmatpush1.msra.mxu0 %v504
  %506 = vmatprep.subr.mxu0 0.0
  %v507 = vand.u32 %v24, 4294901760
  %v508 = vsub.f32 %v24, %v507
  %v509 = vand.u32 %v508, 4294901760
  %510 = vmatpush1.msra.mxu0 %v509
  %511 = vmatprep.subr.mxu0 0.0
  %v512 = vand.u32 %v25, 4294901760
  %v513 = vsub.f32 %v25, %v512
  %v514 = vand.u32 %v513, 4294901760
  %515 = vmatpush1.msra.mxu0 %v514
  %516 = vmatprep.subr.mxu0 0.0
  %v517 = vand.u32 %v26, 4294901760
  %v518 = vsub.f32 %v26, %v517
  %v519 = vand.u32 %v518, 4294901760
  %520 = vmatpush1.msra.mxu0 %v519
  %521 = vmatprep.subr.mxu0 0.0
  %v522 = vand.u32 %v27, 4294901760
  %v523 = vsub.f32 %v27, %v522
  %v524 = vand.u32 %v523, 4294901760
  %525 = vmatpush1.msra.mxu0 %v524
  %526 = vmatprep.subr.mxu0 0.0
  %v527 = vand.u32 %v28, 4294901760
  %v528 = vsub.f32 %v28, %v527
  %v529 = vand.u32 %v528, 4294901760
  %530 = vmatpush1.msra.mxu0 %v529
  %531 = vmatprep.subr.mxu0 0.0
  %v532 = vand.u32 %v29, 4294901760
  %v533 = vsub.f32 %v29, %v532
  %v534 = vand.u32 %v533, 4294901760
  %535 = vmatpush1.msra.mxu0 %v534
  %536 = vmatprep.subr.mxu0 0.0
  %v537 = vand.u32 %v30, 4294901760
  %v538 = vsub.f32 %v30, %v537
  %v539 = vand.u32 %v538, 4294901760
  %540 = vmatpush1.msra.mxu0 %v539
  %541 = vmatprep.subr.mxu0 0.0
  %v542 = vand.u32 %v31, 4294901760
  %v543 = vsub.f32 %v31, %v542
  %v544 = vand.u32 %v543, 4294901760
  %545 = vmatpush1.msra.mxu0 %v544
  %546 = vmatprep.subr.mxu0 0.0
  %v547 = vand.u32 %v32, 4294901760
  %v548 = vsub.f32 %v32, %v547
  %v549 = vand.u32 %v548, 4294901760
  %550 = vmatpush1.msra.mxu0 %v549
  %551 = vmatprep.subr.mxu0 0.0
  %v552 = vand.u32 %v33, 4294901760
  %v553 = vsub.f32 %v33, %v552
  %v554 = vand.u32 %v553, 4294901760
  %555 = vmatpush1.msra.mxu0 %v554
  %556 = vmatprep.subr.mxu0 0.0
  %557 = vmatpush1.msra.mxu0 0.0
  %558 = vmatprep.subr.mxu0 0.0
  %559 = vmatpush1.msra.mxu0 0.0
  %560 = vmatprep.subr.mxu0 0.0
  %561 = vmatpush1.msra.mxu0 0.0
  %562 = vmatprep.subr.mxu0 0.0
  %563 = vmatpush1.msra.mxu0 0.0
  %564 = vmatprep.subr.mxu0 0.0
  %565 = vmatpush1.msra.mxu0 0.0
  %566 = vmatprep.subr.mxu0 0.0
  %567 = vmatpush1.msra.mxu0 0.0
  %568 = vmatprep.subr.mxu0 0.0
  %569 = vmatpush1.msra.mxu0 0.0
  %570 = vmatprep.subr.mxu0 0.0
  %571 = vmatpush1.msra.mxu0 0.0
  %572 = vmatprep.subr.mxu0 0.0
  %573 = vmatpush1.msra.mxu0 0.0
  %574 = vmatprep.subr.mxu0 0.0
  %575 = vmatpush1.msra.mxu0 0.0
  %576 = vmatprep.subr.mxu0 0.0
  %577 = vmatpush1.msra.mxu0 0.0
  %578 = vmatprep.subr.mxu0 0.0
  %579 = vmatpush1.msra.mxu0 0.0
  %580 = vmatprep.subr.mxu0 0.0
  %581 = vmatpush1.msra.mxu0 0.0
  %582 = vmatprep.subr.mxu0 0.0
  %583 = vmatpush1.msra.mxu0 0.0
  %584 = vmatprep.subr.mxu0 0.0
  %585 = vmatpush1.msra.mxu0 0.0
  %586 = vmatprep.subr.mxu0 0.0
  %587 = vmatpush1.msra.mxu0 0.0
  %588 = vmatprep.mubr.f32.mxu0 0.0
  %v589 = vand.u32 %v17, 4294901760
  %590 = vmatmul.mubr.f32.gmra.mrb[0].mxu0 %v589
  %v591 = vpop.f32.mrb[0].mxu0
  %v592 = vadd.f32 %v473, %v591
  %v593 = vpop.f32.mrb[0].mxu0
  %594 = vdwg.mxu0
  %595 = vmatprep.subr.mxu0 0.0
  %v596 = vand.u32 %v18, 4294901760
  %597 = vmatpush1.msra.mxu0 %v596
  %598 = vmatprep.subr.mxu0 0.0
  %v599 = vand.u32 %v19, 4294901760
  %600 = vmatpush1.msra.mxu0 %v599
  %601 = vmatprep.subr.mxu0 0.0
  %v602 = vand.u32 %v20, 4294901760
  %603 = vmatpush1.msra.mxu0 %v602
  %604 = vmatprep.subr.mxu0 0.0
  %v605 = vand.u32 %v21, 4294901760
  %606 = vmatpush1.msra.mxu0 %v605
  %607 = vmatprep.subr.mxu0 0.0
  %v608 = vand.u32 %v22, 4294901760
  %609 = vmatpush1.msra.mxu0 %v608
  %610 = vmatprep.subr.mxu0 0.0
  %v611 = vand.u32 %v23, 4294901760
  %612 = vmatpush1.msra.mxu0 %v611
  %613 = vmatprep.subr.mxu0 0.0
  %v614 = vand.u32 %v24, 4294901760
  %615 = vmatpush1.msra.mxu0 %v614
  %616 = vmatprep.subr.mxu0 0.0
  %v617 = vand.u32 %v25, 4294901760
  %618 = vmatpush1.msra.mxu0 %v617
  %619 = vmatprep.subr.mxu0 0.0
  %v620 = vand.u32 %v26, 4294901760
  %621 = vmatpush1.msra.mxu0 %v620
  %622 = vmatprep.subr.mxu0 0.0
  %v623 = vand.u32 %v27, 4294901760
  %624 = vmatpush1.msra.mxu0 %v623
  %625 = vmatprep.subr.mxu0 0.0
  %v626 = vand.u32 %v28, 4294901760
  %627 = vmatpush1.msra.mxu0 %v626
  %628 = vmatprep.subr.mxu0 0.0
  %v629 = vand.u32 %v29, 4294901760
  %630 = vmatpush1.msra.mxu0 %v629
  %631 = vmatprep.subr.mxu0 0.0
  %v632 = vand.u32 %v30, 4294901760
  %633 = vmatpush1.msra.mxu0 %v632
  %634 = vmatprep.subr.mxu0 0.0
  %v635 = vand.u32 %v31, 4294901760
  %636 = vmatpush1.msra.mxu0 %v635
  %637 = vmatprep.subr.mxu0 0.0
  %v638 = vand.u32 %v32, 4294901760
  %639 = vmatpush1.msra.mxu0 %v638
  %640 = vmatprep.subr.mxu0 0.0
  %v641 = vand.u32 %v33, 4294901760
  %642 = vmatpush1.msra.mxu0 %v641
  %643 = vmatprep.subr.mxu0 0.0
  %644 = vmatpush1.msra.mxu0 0.0
  %645 = vmatprep.subr.mxu0 0.0
  %646 = vmatpush1.msra.mxu0 0.0
  %647 = vmatprep.subr.mxu0 0.0
  %648 = vmatpush1.msra.mxu0 0.0
  %649 = vmatprep.subr.mxu0 0.0
  %650 = vmatpush1.msra.mxu0 0.0
  %651 = vmatprep.subr.mxu0 0.0
  %652 = vmatpush1.msra.mxu0 0.0
  %653 = vmatprep.subr.mxu0 0.0
  %654 = vmatpush1.msra.mxu0 0.0
  %655 = vmatprep.subr.mxu0 0.0
  %656 = vmatpush1.msra.mxu0 0.0
  %657 = vmatprep.subr.mxu0 0.0
  %658 = vmatpush1.msra.mxu0 0.0
  %659 = vmatprep.subr.mxu0 0.0
  %660 = vmatpush1.msra.mxu0 0.0
  %661 = vmatprep.subr.mxu0 0.0
  %662 = vmatpush1.msra.mxu0 0.0
  %663 = vmatprep.subr.mxu0 0.0
  %664 = vmatpush1.msra.mxu0 0.0
  %665 = vmatprep.subr.mxu0 0.0
  %666 = vmatpush1.msra.mxu0 0.0
  %667 = vmatprep.subr.mxu0 0.0
  %668 = vmatpush1.msra.mxu0 0.0
  %669 = vmatprep.subr.mxu0 0.0
  %670 = vmatpush1.msra.mxu0 0.0
  %671 = vmatprep.subr.mxu0 0.0
  %672 = vmatpush1.msra.mxu0 0.0
  %673 = vmatprep.subr.mxu0 0.0
  %674 = vmatpush1.msra.mxu0 0.0
  %675 = vmatprep.mubr.f32.mxu0 0.0
  %v676 = vand.u32 %v17, 4294901760
  %677 = vmatmul.mubr.f32.gmra.mrb[0].mxu0 %v676
  %v678 = vpop.f32.mrb[0].mxu0
  %v679 = vadd.f32 %v592, %v678
  %v680 = vpop.f32.mrb[0].mxu0
  %681 = vdwg.mxu0
  %v682 = vmax.f32 %v679, 0.0
  %v683 = vld [vmem:[%s3] sm:$0xff]
  %v684 = vld [vmem:[%s3 + $0x8] sm:$0xff]
  %v685 = vld [vmem:[%s3 + $0x10] sm:$0xff]
  %v686 = vld [vmem:[%s3 + $0x18] sm:$0xff]
  %v687 = vld [vmem:[%s3 + $0x20] sm:$0xff]
  %v688 = vld [vmem:[%s3 + $0x28] sm:$0xff]
  %v689 = vld [vmem:[%s3 + $0x30] sm:$0xff]
  %v690 = vld [vmem:[%s3 + $0x38] sm:$0xff]
  %v691 = vld [vmem:[%s3 + $0x40] sm:$0xff]
  %v692 = vld [vmem:[%s3 + $0x48] sm:$0xff]
  %vm693 = vcmask 654336
  %v695 = vsel %vm693, %v682, 0
  %697 = vmatprep.subr.mxu0 0.0
  %v698 = vand.u32 %v683, 4294901760
  %699 = vmatpush1.msra.mxu0 %v698
  %700 = vmatprep.subr.mxu0 0.0
  %v701 = vand.u32 %v684, 4294901760
  %702 = vmatpush1.msra.mxu0 %v701
  %703 = vmatprep.subr.mxu0 0.0
  %v704 = vand.u32 %v685, 4294901760
  %705 = vmatpush1.msra.mxu0 %v704
  %706 = vmatprep.subr.mxu0 0.0
  %v707 = vand.u32 %v686, 4294901760
  %708 = vmatpush1.msra.mxu0 %v707
  %709 = vmatprep.subr.mxu0 0.0
  %v710 = vand.u32 %v687, 4294901760
  %711 = vmatpush1.msra.mxu0 %v710
  %712 = vmatprep.subr.mxu0 0.0
  %v713 = vand.u32 %v688, 4294901760
  %714 = vmatpush1.msra.mxu0 %v713
  %715 = vmatprep.subr.mxu0 0.0
  %v716 = vand.u32 %v689, 4294901760
  %717 = vmatpush1.msra.mxu0 %v716
  %718 = vmatprep.subr.mxu0 0.0
  %v719 = vand.u32 %v690, 4294901760
  %720 = vmatpush1.msra.mxu0 %v719
  %721 = vmatprep.subr.mxu0 0.0
  %v722 = vand.u32 %v691, 4294901760
  %723 = vmatpush1.msra.mxu0 %v722
  %724 = vmatprep.subr.mxu0 0.0
  %v725 = vand.u32 %v692, 4294901760
  %726 = vmatpush1.msra.mxu0 %v725
  %727 = vmatprep.subr.mxu0 0.0
  %728 = vmatpush1.msra.mxu0 0.0
  %729 = vmatprep.subr.mxu0 0.0
  %730 = vmatpush1.msra.mxu0 0.0
  %731 = vmatprep.subr.mxu0 0.0
  %732 = vmatpush1.msra.mxu0 0.0
  %733 = vmatprep.subr.mxu0 0.0
  %734 = vmatpush1.msra.mxu0 0.0
  %735 = vmatprep.subr.mxu0 0.0
  %736 = vmatpush1.msra.mxu0 0.0
  %737 = vmatprep.subr.mxu0 0.0
  %738 = vmatpush1.msra.mxu0 0.0
  %739 = vmatprep.subr.mxu0 0.0
  %740 = vmatpush1.msra.mxu0 0.0
  %741 = vmatprep.subr.mxu0 0.0
  %742 = vmatpush1.msra.mxu0 0.0
  %743 = vmatprep.subr.mxu0 0.0
  %744 = vmatpush1.msra.mxu0 0.0
  %745 = vmatprep.subr.mxu0 0.0
  %746 = vmatpush1.msra.mxu0 0.0
  %747 = vmatprep.subr.mxu0 0.0
  %748 = vmatpush1.msra.mxu0 0.0
  %749 = vmatprep.subr.mxu0 0.0
  %750 = vmatpush1.msra.mxu0 0.0
  %751 = vmatprep.subr.mxu0 0.0
  %752 = vmatpush1.msra.mxu0 0.0
  %753 = vmatprep.subr.mxu0 0.0
  %754 = vmatpush1.msra.mxu0 0.0
  %755 = vmatprep.subr.mxu0 0.0
  %756 = vmatpush1.msra.mxu0 0.0
  %757 = vmatprep.subr.mxu0 0.0
  %758 = vmatpush1.msra.mxu0 0.0
  %759 = vmatprep.subr.mxu0 0.0
  %760 = vmatpush1.msra.mxu0 0.0
  %761 = vmatprep.subr.mxu0 0.0
  %762 = vmatpush1.msra.mxu0 0.0
  %763 = vmatprep.subr.mxu0 0.0
  %764 = vmatpush1.msra.mxu0 0.0
  %765 = vmatprep.subr.mxu0 0.0
  %766 = vmatpush1.msra.mxu0 0.0
  %767 = vmatprep.subr.mxu0 0.0
  %768 = vmatpush1.msra.mxu0 0.0
  %769 = vmatprep.subr.mxu0 0.0
  %770 = vmatpush1.msra.mxu0 0.0
  %771 = vmatprep.mubr.f32.mxu0 0.0
  %v772 = vand.u32 %v695, 4294901760
  %v773 = vsub.f32 %v695, %v772
  %v774 = vand.u32 %v773, 4294901760
  %v775 = vsub.f32 %v773, %v774
  %v776 = vand.u32 %v775, 4294901760
  %777 = vmatmul.mubr.f32.gmra.mrb[0].mxu0 %v776
  %v778 = vpop.f32.mrb[0].mxu0
  %v779 = vadd.f32 0.0, %v778
  %v780 = vpop.f32.mrb[0].mxu0
  %781 = vdwg.mxu0
  %782 = vmatprep.subr.mxu0 0.0
  %v783 = vand.u32 %v683, 4294901760
  %v784 = vsub.f32 %v683, %v783
  %v785 = vand.u32 %v784, 4294901760
  %v786 = vsub.f32 %v784, %v785
  %v787 = vand.u32 %v786, 4294901760
  %788 = vmatpush1.msra.mxu0 %v787
  %789 = vmatprep.subr.mxu0 0.0
  %v790 = vand.u32 %v684, 4294901760
  %v791 = vsub.f32 %v684, %v790
  %v792 = vand.u32 %v791, 4294901760
  %v793 = vsub.f32 %v791, %v792
  %v794 = vand.u32 %v793, 4294901760
  %795 = vmatpush1.msra.mxu0 %v794
  %796 = vmatprep.subr.mxu0 0.0
  %v797 = vand.u32 %v685, 4294901760
  %v798 = vsub.f32 %v685, %v797
  %v799 = vand.u32 %v798, 4294901760
  %v800 = vsub.f32 %v798, %v799
  %v801 = vand.u32 %v800, 4294901760
  %802 = vmatpush1.msra.mxu0 %v801
  %803 = vmatprep.subr.mxu0 0.0
  %v804 = vand.u32 %v686, 4294901760
  %v805 = vsub.f32 %v686, %v804
  %v806 = vand.u32 %v805, 4294901760
  %v807 = vsub.f32 %v805, %v806
  %v808 = vand.u32 %v807, 4294901760
  %809 = vmatpush1.msra.mxu0 %v808
  %810 = vmatprep.subr.mxu0 0.0
  %v811 = vand.u32 %v687, 4294901760
  %v812 = vsub.f32 %v687, %v811
  %v813 = vand.u32 %v812, 4294901760
  %v814 = vsub.f32 %v812, %v813
  %v815 = vand.u32 %v814, 4294901760
  %816 = vmatpush1.msra.mxu0 %v815
  %817 = vmatprep.subr.mxu0 0.0
  %v818 = vand.u32 %v688, 4294901760
  %v819 = vsub.f32 %v688, %v818
  %v820 = vand.u32 %v819, 4294901760
  %v821 = vsub.f32 %v819, %v820
  %v822 = vand.u32 %v821, 4294901760
  %823 = vmatpush1.msra.mxu0 %v822
  %824 = vmatprep.subr.mxu0 0.0
  %v825 = vand.u32 %v689, 4294901760
  %v826 = vsub.f32 %v689, %v825
  %v827 = vand.u32 %v826, 4294901760
  %v828 = vsub.f32 %v826, %v827
  %v829 = vand.u32 %v828, 4294901760
  %830 = vmatpush1.msra.mxu0 %v829
  %831 = vmatprep.subr.mxu0 0.0
  %v832 = vand.u32 %v690, 4294901760
  %v833 = vsub.f32 %v690, %v832
  %v834 = vand.u32 %v833, 4294901760
  %v835 = vsub.f32 %v833, %v834
  %v836 = vand.u32 %v835, 4294901760
  %837 = vmatpush1.msra.mxu0 %v836
  %838 = vmatprep.subr.mxu0 0.0
  %v839 = vand.u32 %v691, 4294901760
  %v840 = vsub.f32 %v691, %v839
  %v841 = vand.u32 %v840, 4294901760
  %v842 = vsub.f32 %v840, %v841
  %v843 = vand.u32 %v842, 4294901760
  %844 = vmatpush1.msra.mxu0 %v843
  %845 = vmatprep.subr.mxu0 0.0
  %v846 = vand.u32 %v692, 4294901760
  %v847 = vsub.f32 %v692, %v846
  %v848 = vand.u32 %v847, 4294901760
  %v849 = vsub.f32 %v847, %v848
  %v850 = vand.u32 %v849, 4294901760
  %851 = vmatpush1.msra.mxu0 %v850
  %852 = vmatprep.subr.mxu0 0.0
  %853 = vmatpush1.msra.mxu0 0.0
  %854 = vmatprep.subr.mxu0 0.0
  %855 = vmatpush1.msra.mxu0 0.0
  %856 = vmatprep.subr.mxu0 0.0
  %857 = vmatpush1.msra.mxu0 0.0
  %858 = vmatprep.subr.mxu0 0.0
  %859 = vmatpush1.msra.mxu0 0.0
  %860 = vmatprep.subr.mxu0 0.0
  %861 = vmatpush1.msra.mxu0 0.0
  %862 = vmatprep.subr.mxu0 0.0
  %863 = vmatpush1.msra.mxu0 0.0
  %864 = vmatprep.subr.mxu0 0.0
  %865 = vmatpush1.msra.mxu0 0.0
  %866 = vmatprep.subr.mxu0 0.0
  %867 = vmatpush1.msra.mxu0 0.0
  %868 = vmatprep.subr.mxu0 0.0
  %869 = vmatpush1.msra.mxu0 0.0
  %870 = vmatprep.subr.mxu0 0.0
  %871 = vmatpush1.msra.mxu0 0.0
  %872 = vmatprep.subr.mxu0 0.0
  %873 = vmatpush1.msra.mxu0 0.0
  %874 = vmatprep.subr.mxu0 0.0
  %875 = vmatpush1.msra.mxu0 0.0
  %876 = vmatprep.subr.mxu0 0.0
  %877 = vmatpush1.msra.mxu0 0.0
  %878 = vmatprep.subr.mxu0 0.0
  %879 = vmatpush1.msra.mxu0 0.0
  %880 = vmatprep.subr.mxu0 0.0
  %881 = vmatpush1.msra.mxu0 0.0
  %882 = vmatprep.subr.mxu0 0.0
  %883 = vmatpush1.msra.mxu0 0.0
  %884 = vmatprep.subr.mxu0 0.0
  %885 = vmatpush1.msra.mxu0 0.0
  %886 = vmatprep.subr.mxu0 0.0
  %887 = vmatpush1.msra.mxu0 0.0
  %888 = vmatprep.subr.mxu0 0.0
  %889 = vmatpush1.msra.mxu0 0.0
  %890 = vmatprep.subr.mxu0 0.0
  %891 = vmatpush1.msra.mxu0 0.0
  %892 = vmatprep.subr.mxu0 0.0
  %893 = vmatpush1.msra.mxu0 0.0
  %894 = vmatprep.subr.mxu0 0.0
  %895 = vmatpush1.msra.mxu0 0.0
  %896 = vmatprep.mubr.f32.mxu0 0.0
  %v897 = vand.u32 %v695, 4294901760
  %898 = vmatmul.mubr.f32.gmra.mrb[0].mxu0 %v897
  %v899 = vpop.f32.mrb[0].mxu0
  %v900 = vadd.f32 %v779, %v899
  %v901 = vpop.f32.mrb[0].mxu0
  %902 = vdwg.mxu0
  %903 = vmatprep.subr.mxu0 0.0
  %v904 = vand.u32 %v683, 4294901760
  %v905 = vsub.f32 %v683, %v904
  %906 = vmatpush1.msra.mxu0 %v905
  %907 = vmatprep.subr.mxu0 0.0
  %v908 = vand.u32 %v684, 4294901760
  %v909 = vsub.f32 %v684, %v908
  %910 = vmatpush1.msra.mxu0 %v909
  %911 = vmatprep.subr.mxu0 0.0
  %v912 = vand.u32 %v685, 4294901760
  %v913 = vsub.f32 %v685, %v912
  %914 = vmatpush1.msra.mxu0 %v913
  %915 = vmatprep.subr.mxu0 0.0
  %v916 = vand.u32 %v686, 4294901760
  %v917 = vsub.f32 %v686, %v916
  %918 = vmatpush1.msra.mxu0 %v917
  %919 = vmatprep.subr.mxu0 0.0
  %v920 = vand.u32 %v687, 4294901760
  %v921 = vsub.f32 %v687, %v920
  %922 = vmatpush1.msra.mxu0 %v921
  %923 = vmatprep.subr.mxu0 0.0
  %v924 = vand.u32 %v688, 4294901760
  %v925 = vsub.f32 %v688, %v924
  %926 = vmatpush1.msra.mxu0 %v925
  %927 = vmatprep.subr.mxu0 0.0
  %v928 = vand.u32 %v689, 4294901760
  %v929 = vsub.f32 %v689, %v928
  %930 = vmatpush1.msra.mxu0 %v929
  %931 = vmatprep.subr.mxu0 0.0
  %v932 = vand.u32 %v690, 4294901760
  %v933 = vsub.f32 %v690, %v932
  %934 = vmatpush1.msra.mxu0 %v933
  %935 = vmatprep.subr.mxu0 0.0
  %v936 = vand.u32 %v691, 4294901760
  %v937 = vsub.f32 %v691, %v936
  %938 = vmatpush1.msra.mxu0 %v937
  %939 = vmatprep.subr.mxu0 0.0
  %v940 = vand.u32 %v692, 4294901760
  %v941 = vsub.f32 %v692, %v940
  %942 = vmatpush1.msra.mxu0 %v941
  %943 = vmatprep.subr.mxu0 0.0
  %944 = vmatpush1.msra.mxu0 0.0
  %945 = vmatprep.subr.mxu0 0.0
  %946 = vmatpush1.msra.mxu0 0.0
  %947 = vmatprep.subr.mxu0 0.0
  %948 = vmatpush1.msra.mxu0 0.0
  %949 = vmatprep.subr.mxu0 0.0
  %950 = vmatpush1.msra.mxu0 0.0
  %951 = vmatprep.subr.mxu0 0.0
  %952 = vmatpush1.msra.mxu0 0.0
  %953 = vmatprep.subr.mxu0 0.0
  %954 = vmatpush1.msra.mxu0 0.0
  %955 = vmatprep.subr.mxu0 0.0
  %956 = vmatpush1.msra.mxu0 0.0
  %957 = vmatprep.subr.mxu0 0.0
  %958 = vmatpush1.msra.mxu0 0.0
  %959 = vmatprep.subr.mxu0 0.0
  %960 = vmatpush1.msra.mxu0 0.0
  %961 = vmatprep.subr.mxu0 0.0
  %962 = vmatpush1.msra.mxu0 0.0
  %963 = vmatprep.subr.mxu0 0.0
  %964 = vmatpush1.msra.mxu0 0.0
  %965 = vmatprep.subr.mxu0 0.0
  %966 = vmatpush1.msra.mxu0 0.0
  %967 = vmatprep.subr.mxu0 0.0
  %968 = vmatpush1.msra.mxu0 0.0
  %969 = vmatprep.subr.mxu0 0.0
  %970 = vmatpush1.msra.mxu0 0.0
  %971 = vmatprep.subr.mxu0 0.0
  %972 = vmatpush1.msra.mxu0 0.0
  %973 = vmatprep.subr.mxu0 0.0
  %974 = vmatpush1.msra.mxu0 0.0
  %975 = vmatprep.subr.mxu0 0.0
  %976 = vmatpush1.msra.mxu0 0.0
  %977 = vmatprep.subr.mxu0 0.0
  %978 = vmatpush1.msra.mxu0 0.0
  %979 = vmatprep.subr.mxu0 0.0
  %980 = vmatpush1.msra.mxu0 0.0
  %981 = vmatprep.subr.mxu0 0.0
  %982 = vmatpush1.msra.mxu0 0.0
  %983 = vmatprep.subr.mxu0 0.0
  %984 = vmatpush1.msra.mxu0 0.0
  %985 = vmatprep.subr.mxu0 0.0
  %986 = vmatpush1.msra.mxu0 0.0
  %987 = vmatprep.mubr.f32.mxu0 0.0
  %v988 = vand.u32 %v695, 4294901760
  %v989 = vsub.f32 %v695, %v988
  %990 = vmatmul.mubr.f32.gmra.mrb[0].mxu0 %v989
  %v991 = vpop.f32.mrb[0].mxu0
  %v992 = vadd.f32 %v900, %v991
  %v993 = vpop.f32.mrb[0].mxu0
  %994 = vdwg.mxu0
  %995 = vmatprep.subr.mxu0 0.0
  %v996 = vand.u32 %v683, 4294901760
  %997 = vmatpush1.msra.mxu0 %v996
  %998 = vmatprep.subr.mxu0 0.0
  %v999 = vand.u32 %v684, 4294901760
  %1000 = vmatpush1.msra.mxu0 %v999
  %1001 = vmatprep.subr.mxu0 0.0
  %v1002 = vand.u32 %v685, 4294901760
  %1003 = vmatpush1.msra.mxu0 %v1002
  %1004 = vmatprep.subr.mxu0 0.0
  %v1005 = vand.u32 %v686, 4294901760
  %1006 = vmatpush1.msra.mxu0 %v1005
  %1007 = vmatprep.subr.mxu0 0.0
  %v1008 = vand.u32 %v687, 4294901760
  %1009 = vmatpush1.msra.mxu0 %v1008
  %1010 = vmatprep.subr.mxu0 0.0
  %v1011 = vand.u32 %v688, 4294901760
  %1012 = vmatpush1.msra.mxu0 %v1011
  %1013 = vmatprep.subr.mxu0 0.0
  %v1014 = vand.u32 %v689, 4294901760
  %1015 = vmatpush1.msra.mxu0 %v1014
  %1016 = vmatprep.subr.mxu0 0.0
  %v1017 = vand.u32 %v690, 4294901760
  %1018 = vmatpush1.msra.mxu0 %v1017
  %1019 = vmatprep.subr.mxu0 0.0
  %v1020 = vand.u32 %v691, 4294901760
  %1021 = vmatpush1.msra.mxu0 %v1020
  %1022 = vmatprep.subr.mxu0 0.0
  %v1023 = vand.u32 %v692, 4294901760
  %1024 = vmatpush1.msra.mxu0 %v1023
  %1025 = vmatprep.subr.mxu0 0.0
  %1026 = vmatpush1.msra.mxu0 0.0
  %1027 = vmatprep.subr.mxu0 0.0
  %1028 = vmatpush1.msra.mxu0 0.0
  %1029 = vmatprep.subr.mxu0 0.0
  %1030 = vmatpush1.msra.mxu0 0.0
  %1031 = vmatprep.subr.mxu0 0.0
  %1032 = vmatpush1.msra.mxu0 0.0
  %1033 = vmatprep.subr.mxu0 0.0
  %1034 = vmatpush1.msra.mxu0 0.0
  %1035 = vmatprep.subr.mxu0 0.0
  %1036 = vmatpush1.msra.mxu0 0.0
  %1037 = vmatprep.subr.mxu0 0.0
  %1038 = vmatpush1.msra.mxu0 0.0
  %1039 = vmatprep.subr.mxu0 0.0
  %1040 = vmatpush1.msra.mxu0 0.0
  %1041 = vmatprep.subr.mxu0 0.0
  %1042 = vmatpush1.msra.mxu0 0.0
  %1043 = vmatprep.subr.mxu0 0.0
  %1044 = vmatpush1.msra.mxu0 0.0
  %1045 = vmatprep.subr.mxu0 0.0
  %1046 = vmatpush1.msra.mxu0 0.0
  %1047 = vmatprep.subr.mxu0 0.0
  %1048 = vmatpush1.msra.mxu0 0.0
  %1049 = vmatprep.subr.mxu0 0.0
  %1050 = vmatpush1.msra.mxu0 0.0
  %1051 = vmatprep.subr.mxu0 0.0
  %1052 = vmatpush1.msra.mxu0 0.0
  %1053 = vmatprep.subr.mxu0 0.0
  %1054 = vmatpush1.msra.mxu0 0.0
  %1055 = vmatprep.subr.mxu0 0.0
  %1056 = vmatpush1.msra.mxu0 0.0
  %1057 = vmatprep.subr.mxu0 0.0
  %1058 = vmatpush1.msra.mxu0 0.0
  %1059 = vmatprep.subr.mxu0 0.0
  %1060 = vmatpush1.msra.mxu0 0.0
  %1061 = vmatprep.subr.mxu0 0.0
  %1062 = vmatpush1.msra.mxu0 0.0
  %1063 = vmatprep.subr.mxu0 0.0
  %1064 = vmatpush1.msra.mxu0 0.0
  %1065 = vmatprep.subr.mxu0 0.0
  %1066 = vmatpush1.msra.mxu0 0.0
  %1067 = vmatprep.subr.mxu0 0.0
  %1068 = vmatpush1.msra.mxu0 0.0
  %1069 = vmatprep.mubr.f32.mxu0 0.0
  %v1070 = vand.u32 %v695, 4294901760
  %v1071 = vsub.f32 %v695, %v1070
  %v1072 = vand.u32 %v1071, 4294901760
  %1073 = vmatmul.mubr.f32.gmra.mrb[0].mxu0 %v1072
  %v1074 = vpop.f32.mrb[0].mxu0
  %v1075 = vadd.f32 %v992, %v1074
  %v1076 = vpop.f32.mrb[0].mxu0
  %1077 = vdwg.mxu0
  %1078 = vmatprep.subr.mxu0 0.0
  %v1079 = vand.u32 %v683, 4294901760
  %v1080 = vsub.f32 %v683, %v1079
  %v1081 = vand.u32 %v1080, 4294901760
  %1082 = vmatpush1.msra.mxu0 %v1081
  %1083 = vmatprep.subr.mxu0 0.0
  %v1084 = vand.u32 %v684, 4294901760
  %v1085 = vsub.f32 %v684, %v1084
  %v1086 = vand.u32 %v1085, 4294901760
  %1087 = vmatpush1.msra.mxu0 %v1086
  %1088 = vmatprep.subr.mxu0 0.0
  %v1089 = vand.u32 %v685, 4294901760
  %v1090 = vsub.f32 %v685, %v1089
  %v1091 = vand.u32 %v1090, 4294901760
  %1092 = vmatpush1.msra.mxu0 %v1091
  %1093 = vmatprep.subr.mxu0 0.0
  %v1094 = vand.u32 %v686, 4294901760
  %v1095 = vsub.f32 %v686, %v1094
  %v1096 = vand.u32 %v1095, 4294901760
  %1097 = vmatpush1.msra.mxu0 %v1096
  %1098 = vmatprep.subr.mxu0 0.0
  %v1099 = vand.u32 %v687, 4294901760
  %v1100 = vsub.f32 %v687, %v1099
  %v1101 = vand.u32 %v1100, 4294901760
  %1102 = vmatpush1.msra.mxu0 %v1101
  %1103 = vmatprep.subr.mxu0 0.0
  %v1104 = vand.u32 %v688, 4294901760
  %v1105 = vsub.f32 %v688, %v1104
  %v1106 = vand.u32 %v1105, 4294901760
  %1107 = vmatpush1.msra.mxu0 %v1106
  %1108 = vmatprep.subr.mxu0 0.0
  %v1109 = vand.u32 %v689, 4294901760
  %v1110 = vsub.f32 %v689, %v1109
  %v1111 = vand.u32 %v1110, 4294901760
  %1112 = vmatpush1.msra.mxu0 %v1111
  %1113 = vmatprep.subr.mxu0 0.0
  %v1114 = vand.u32 %v690, 4294901760
  %v1115 = vsub.f32 %v690, %v1114
  %v1116 = vand.u32 %v1115, 4294901760
  %1117 = vmatpush1.msra.mxu0 %v1116
  %1118 = vmatprep.subr.mxu0 0.0
  %v1119 = vand.u32 %v691, 4294901760
  %v1120 = vsub.f32 %v691, %v1119
  %v1121 = vand.u32 %v1120, 4294901760
  %1122 = vmatpush1.msra.mxu0 %v1121
  %1123 = vmatprep.subr.mxu0 0.0
  %v1124 = vand.u32 %v692, 4294901760
  %v1125 = vsub.f32 %v692, %v1124
  %v1126 = vand.u32 %v1125, 4294901760
  %1127 = vmatpush1.msra.mxu0 %v1126
  %1128 = vmatprep.subr.mxu0 0.0
  %1129 = vmatpush1.msra.mxu0 0.0
  %1130 = vmatprep.subr.mxu0 0.0
  %1131 = vmatpush1.msra.mxu0 0.0
  %1132 = vmatprep.subr.mxu0 0.0
  %1133 = vmatpush1.msra.mxu0 0.0
  %1134 = vmatprep.subr.mxu0 0.0
  %1135 = vmatpush1.msra.mxu0 0.0
  %1136 = vmatprep.subr.mxu0 0.0
  %1137 = vmatpush1.msra.mxu0 0.0
  %1138 = vmatprep.subr.mxu0 0.0
  %1139 = vmatpush1.msra.mxu0 0.0
  %1140 = vmatprep.subr.mxu0 0.0
  %1141 = vmatpush1.msra.mxu0 0.0
  %1142 = vmatprep.subr.mxu0 0.0
  %1143 = vmatpush1.msra.mxu0 0.0
  %1144 = vmatprep.subr.mxu0 0.0
  %1145 = vmatpush1.msra.mxu0 0.0
  %1146 = vmatprep.subr.mxu0 0.0
  %1147 = vmatpush1.msra.mxu0 0.0
  %1148 = vmatprep.subr.mxu0 0.0
  %1149 = vmatpush1.msra.mxu0 0.0
  %1150 = vmatprep.subr.mxu0 0.0
  %1151 = vmatpush1.msra.mxu0 0.0
  %1152 = vmatprep.subr.mxu0 0.0
  %1153 = vmatpush1.msra.mxu0 0.0
  %1154 = vmatprep.subr.mxu0 0.0
  %1155 = vmatpush1.msra.mxu0 0.0
  %1156 = vmatprep.subr.mxu0 0.0
  %1157 = vmatpush1.msra.mxu0 0.0
  %1158 = vmatprep.subr.mxu0 0.0
  %1159 = vmatpush1.msra.mxu0 0.0
  %1160 = vmatprep.subr.mxu0 0.0
  %1161 = vmatpush1.msra.mxu0 0.0
  %1162 = vmatprep.subr.mxu0 0.0
  %1163 = vmatpush1.msra.mxu0 0.0
  %1164 = vmatprep.subr.mxu0 0.0
  %1165 = vmatpush1.msra.mxu0 0.0
  %1166 = vmatprep.subr.mxu0 0.0
  %1167 = vmatpush1.msra.mxu0 0.0
  %1168 = vmatprep.subr.mxu0 0.0
  %1169 = vmatpush1.msra.mxu0 0.0
  %1170 = vmatprep.subr.mxu0 0.0
  %1171 = vmatpush1.msra.mxu0 0.0
  %1172 = vmatprep.mubr.f32.mxu0 0.0
  %v1173 = vand.u32 %v695, 4294901760
  %1174 = vmatmul.mubr.f32.gmra.mrb[0].mxu0 %v1173
  %v1175 = vpop.f32.mrb[0].mxu0
  %v1176 = vadd.f32 %v1075, %v1175
  %v1177 = vpop.f32.mrb[0].mxu0
  %1178 = vdwg.mxu0
  %1179 = vmatprep.subr.mxu0 0.0
  %v1180 = vand.u32 %v683, 4294901760
  %1181 = vmatpush1.msra.mxu0 %v1180
  %1182 = vmatprep.subr.mxu0 0.0
  %v1183 = vand.u32 %v684, 4294901760
  %1184 = vmatpush1.msra.mxu0 %v1183
  %1185 = vmatprep.subr.mxu0 0.0
  %v1186 = vand.u32 %v685, 4294901760
  %1187 = vmatpush1.msra.mxu0 %v1186
  %1188 = vmatprep.subr.mxu0 0.0
  %v1189 = vand.u32 %v686, 4294901760
  %1190 = vmatpush1.msra.mxu0 %v1189
  %1191 = vmatprep.subr.mxu0 0.0
  %v1192 = vand.u32 %v687, 4294901760
  %1193 = vmatpush1.msra.mxu0 %v1192
  %1194 = vmatprep.subr.mxu0 0.0
  %v1195 = vand.u32 %v688, 4294901760
  %1196 = vmatpush1.msra.mxu0 %v1195
  %1197 = vmatprep.subr.mxu0 0.0
  %v1198 = vand.u32 %v689, 4294901760
  %1199 = vmatpush1.msra.mxu0 %v1198
  %1200 = vmatprep.subr.mxu0 0.0
  %v1201 = vand.u32 %v690, 4294901760
  %1202 = vmatpush1.msra.mxu0 %v1201
  %1203 = vmatprep.subr.mxu0 0.0
  %v1204 = vand.u32 %v691, 4294901760
  %1205 = vmatpush1.msra.mxu0 %v1204
  %1206 = vmatprep.subr.mxu0 0.0
  %v1207 = vand.u32 %v692, 4294901760
  %1208 = vmatpush1.msra.mxu0 %v1207
  %1209 = vmatprep.subr.mxu0 0.0
  %1210 = vmatpush1.msra.mxu0 0.0
  %1211 = vmatprep.subr.mxu0 0.0
  %1212 = vmatpush1.msra.mxu0 0.0
  %1213 = vmatprep.subr.mxu0 0.0
  %1214 = vmatpush1.msra.mxu0 0.0
  %1215 = vmatprep.subr.mxu0 0.0
  %1216 = vmatpush1.msra.mxu0 0.0
  %1217 = vmatprep.subr.mxu0 0.0
  %1218 = vmatpush1.msra.mxu0 0.0
  %1219 = vmatprep.subr.mxu0 0.0
  %1220 = vmatpush1.msra.mxu0 0.0
  %1221 = vmatprep.subr.mxu0 0.0
  %1222 = vmatpush1.msra.mxu0 0.0
  %1223 = vmatprep.subr.mxu0 0.0
  %1224 = vmatpush1.msra.mxu0 0.0
  %1225 = vmatprep.subr.mxu0 0.0
  %1226 = vmatpush1.msra.mxu0 0.0
  %1227 = vmatprep.subr.mxu0 0.0
  %1228 = vmatpush1.msra.mxu0 0.0
  %1229 = vmatprep.subr.mxu0 0.0
  %1230 = vmatpush1.msra.mxu0 0.0
  %1231 = vmatprep.subr.mxu0 0.0
  %1232 = vmatpush1.msra.mxu0 0.0
  %1233 = vmatprep.subr.mxu0 0.0
  %1234 = vmatpush1.msra.mxu0 0.0
  %1235 = vmatprep.subr.mxu0 0.0
  %1236 = vmatpush1.msra.mxu0 0.0
  %1237 = vmatprep.subr.mxu0 0.0
  %1238 = vmatpush1.msra.mxu0 0.0
  %1239 = vmatprep.subr.mxu0 0.0
  %1240 = vmatpush1.msra.mxu0 0.0
  %1241 = vmatprep.subr.mxu0 0.0
  %1242 = vmatpush1.msra.mxu0 0.0
  %1243 = vmatprep.subr.mxu0 0.0
  %1244 = vmatpush1.msra.mxu0 0.0
  %1245 = vmatprep.subr.mxu0 0.0
  %1246 = vmatpush1.msra.mxu0 0.0
  %1247 = vmatprep.subr.mxu0 0.0
  %1248 = vmatpush1.msra.mxu0 0.0
  %1249 = vmatprep.subr.mxu0 0.0
  %1250 = vmatpush1.msra.mxu0 0.0
  %1251 = vmatprep.subr.mxu0 0.0
  %1252 = vmatpush1.msra.mxu0 0.0
  %1253 = vmatprep.mubr.f32.mxu0 0.0
  %v1254 = vand.u32 %v695, 4294901760
  %1255 = vmatmul.mubr.f32.gmra.mrb[0].mxu0 %v1254
  %v1256 = vpop.f32.mrb[0].mxu0
  %v1257 = vadd.f32 %v1176, %v1256
  %v1258 = vpop.f32.mrb[0].mxu0
  %1259 = vdwg.mxu0
  %vm1260 = vcmask 785408
  %1261 = vst.msk [vmem:[%s4] sm:$0xff] %vm1260, %v1257
  // Predicated region
  $region18: #{_ensemble_forward_packed.1} parent=0 // pred_check
    _
  $region19: #{_ensemble_forward_packed.1} parent=0 // pred_check_branch
    %1263 = sbr.rel (0) target = $region21
  $region20: #{_ensemble_forward_packed.1} parent=0 // pred_region
    _
  $region21: #{_ensemble_forward_packed.1} parent=0 // pred_fallthru
    _
  // Predicated region
  $region22: #{_ensemble_forward_packed.1} parent=0 // pred_check
    _
  $region23: #{_ensemble_forward_packed.1} parent=0 // pred_check_branch
    %1265 = sbr.rel (0) target = $region25
  $region24: #{_ensemble_forward_packed.1} parent=0 // pred_region
    _
  $region25: #{_ensemble_forward_packed.1} parent=0 // pred_fallthru
    _

</llo_original>
